<compile_context>
chip_gen: v6e
topology: v6e:2x2x1
jax: 0.10.0
libtpu: 0.0.40
codegen_flags: <defaults>
</compile_context>

<pallas_src>
import functools

import jax
import jax.numpy as jnp
from jax.experimental import pallas as pl
from jax.experimental.pallas import tpu as pltpu

_LANES = 128
_SUBLANES = 8


def _round_up(x, m):
    return ((x + m - 1) // m) * m


def _cdiv(a, b):
    return (a + b - 1) // b


def _chunk_sum(v):
    """(R, 128) -> (8, 128): add the R/8 vreg-aligned sublane chunks.

    The reshape only splits the leading dim on an 8-sublane boundary, so this
    lowers to pure VALU vreg adds (no XLU cross-lane/sublane work).
    """
    r, c = v.shape
    return jnp.sum(v.reshape(r // _SUBLANES, _SUBLANES, c), axis=0)


def _sum_all(acc):
    """(8, 128) accumulator -> (1, 1). Runs once per statistic, at finalize."""
    return jnp.sum(jnp.sum(acc, axis=1, keepdims=True), axis=0, keepdims=True)


def _zero_pad_tail(t, v, block_rows, n):
    """Zero elements whose flat index >= n (padded tail).

    Only traced when the batch is not lane/tile aligned.  int32 flat indices
    are fine for any realistic score-batch size (< 2**31 elements).
    """
    rows_i = jax.lax.broadcasted_iota(jnp.int32, v.shape, 0)
    lanes_i = jax.lax.broadcasted_iota(jnp.int32, v.shape, 1)
    gidx = (t * block_rows + rows_i) * _LANES + lanes_i
    return jnp.where(gidx < n, v, 0.0)


def _abs_pow(v, e):
    """|v| ** e; small integer exponents as multiply chains (VALU, not EUP)."""
    if e == 1:
        return jnp.abs(v)
    if e == 2:
        return v * v
    if isinstance(e, int) and 2 < e <= 8:
        a = jnp.abs(v)
        r = a
        for _ in range(e - 1):
            r = r * a
        return r
    return jnp.power(jnp.abs(v), e)


def _root(s, e):
    if e == 1:
        return s
    if e == 2:
        return jnp.sqrt(s)
    return jnp.power(s, 1.0 / e)


def _nin_kernel(x_ref, y_ref, out_ref,
                ax_ref, ay_ref, bx_ref, by_ref, sp_ref,
                mx_ref, my_ref, inx_ref, iny_ref,
                *, n, p, q, block_rows, num_tiles, has_pad, weight_over_scale):
    phase = pl.program_id(0)
    t = pl.program_id(1)
    last_t = num_tiles - 1

    n_f = jnp.float32(n)
    eps = jnp.float32(1e-12)          # F.normalize default eps

    def mask(v):
        # No-op (not even traced) when N is lane/tile aligned.
        return _zero_pad_tail(t, v, block_rows, n) if has_pad else v

    @pl.when((phase == 0) & (t == 0))
    def _init():
        z = jnp.zeros_like(ax_ref)
        ax_ref[...] = z
        ay_ref[...] = z
        bx_ref[...] = z
        by_ref[...] = z
        sp_ref[...] = z

    if q == 2:
        # ---- phase 0: shifted sums & sums of squares (single pass) ----------
        @pl.when(phase == 0)
        def _phase0():
            x = x_ref[...].astype(jnp.float32)
            y = y_ref[...].astype(jnp.float32)

            @pl.when(t == 0)
            def _capture_shift():
                # Coarse per-batch shift (first real element) so the one-pass
                # second moment does not cancel when scores cluster far from 0.
                mx_ref[...] = x[0:1, 0:1]
                my_ref[...] = y[0:1, 0:1]

            xc = mask(x - mx_ref[...])            # padded entries -> exactly 0
            yc = mask(y - my_ref[...])
            ax_ref[...] += _chunk_sum(xc)
            bx_ref[...] += _chunk_sum(xc * xc)
            ay_ref[...] += _chunk_sum(yc)
            by_ref[...] += _chunk_sum(yc * yc)

            @pl.when(t == last_t)
            def _finalize0():
                dx = _sum_all(ax_ref[...]) / n_f          # mean_x - shift_x
                dy = _sum_all(ay_ref[...]) / n_f
                ssx = jnp.maximum(_sum_all(bx_ref[...]) - n_f * dx * dx, 0.0)
                ssy = jnp.maximum(_sum_all(by_ref[...]) - n_f * dy * dy, 0.0)
                mx_ref[...] = mx_ref[...] + dx            # mean_x
                my_ref[...] = my_ref[...] + dy            # mean_y
                inx_ref[...] = 1.0 / jnp.maximum(jnp.sqrt(ssx), eps)
                iny_ref[...] = 1.0 / jnp.maximum(jnp.sqrt(ssy), eps)

        final_phase = 1
    else:
        # ---- phase 0: plain sums (zero padding contributes exactly 0) -------
        @pl.when(phase == 0)
        def _phase0():
            x = x_ref[...].astype(jnp.float32)
            y = y_ref[...].astype(jnp.float32)
            ax_ref[...] += _chunk_sum(x)
            ay_ref[...] += _chunk_sum(y)

            @pl.when(t == last_t)
            def _finalize0():
                mx_ref[...] = _sum_all(ax_ref[...]) / n_f
                my_ref[...] = _sum_all(ay_ref[...]) / n_f

        # ---- phase 1: q-norms of the centered values -------------------------
        @pl.when(phase == 1)
        def _phase1():
            x = x_ref[...].astype(jnp.float32)
            y = y_ref[...].astype(jnp.float32)
            xc = mask(x - mx_ref[...])
            yc = mask(y - my_ref[...])
            bx_ref[...] += _chunk_sum(_abs_pow(xc, q))
            by_ref[...] += _chunk_sum(_abs_pow(yc, q))

            @pl.when(t == last_t)
            def _finalize1():
                nx = _root(jnp.maximum(_sum_all(bx_ref[...]), 0.0), q)
                ny = _root(jnp.maximum(_sum_all(by_ref[...]), 0.0), q)
                inx_ref[...] = 1.0 / jnp.maximum(nx, eps)
                iny_ref[...] = 1.0 / jnp.maximum(ny, eps)

        final_phase = 2

    # ---- final phase: p-norm of (vx * inv_nx - vy * inv_ny) ------------------
    @pl.when(phase == final_phase)
    def _phase_final():
        x = x_ref[...].astype(jnp.float32)
        y = y_ref[...].astype(jnp.float32)
        diff = (x - mx_ref[...]) * inx_ref[...] - (y - my_ref[...]) * iny_ref[...]
        sp_ref[...] += _chunk_sum(_abs_pow(mask(diff), p))

        @pl.when(t == last_t)
        def _finalize():
            s = _sum_all(sp_ref[...])
            out_ref[...] = _root(s, p) * jnp.float32(weight_over_scale)


def nin_loss(pred, target, loss_weight=1.0, p=1, q=2, max_block_rows=8192):
    """JAX/Pallas equivalent of NiNLoss.forward(pred, target).

    pred, target: (N, 1) (or (N,)) arrays, any float dtype (f32 math in-kernel).
    Returns a scalar float32.
    """
    n = pred.shape[0]
    if n <= 1:
        # batch_size == 1 branch of the PyTorch module: plain L1 loss.
        return jnp.float32(loss_weight) * jnp.mean(
            jnp.abs(pred.astype(jnp.float32) - target.astype(jnp.float32)))

    # scale = 2^p * N^max(0, 1 - p/q)   (static python math)
    scale = (2.0 ** p) * (float(n) ** max(0.0, 1.0 - p / q))
    weight_over_scale = float(loss_weight) / scale

    # Lane-dense layout: flatten and view as (rows, 128).  A single resident
    # block (<= max_block_rows rows ~ 4 MiB f32/stream) is used whenever it
    # fits, so the multi-phase grid reads HBM only once per stream.
    rows = _cdiv(n, _LANES)
    block_rows = min(_round_up(rows, _SUBLANES),
                     _round_up(max(int(max_block_rows), _SUBLANES), _SUBLANES))
    num_tiles = _cdiv(rows, block_rows)
    rows_pad = num_tiles * block_rows
    n_pad = rows_pad * _LANES
    has_pad = n_pad != n

    def to_tiles(v):
        v = v.reshape(-1)                         # native dtype; cast in-kernel
        if has_pad:
            # Minimal zero pad to the tile grid (skipped entirely when aligned).
            v = jnp.pad(v, (0, n_pad - n))
        return v.reshape(rows_pad, _LANES)

    x = to_tiles(pred)
    y = to_tiles(target)

    num_phases = 2 if q == 2 else 3

    kernel = functools.partial(
        _nin_kernel, n=n, p=p, q=q, block_rows=block_rows, num_tiles=num_tiles,
        has_pad=has_pad, weight_over_scale=weight_over_scale)

    # TODO(synk): on v7x (2 TensorCores) the tile axis could be split across
    # cores with per-core partial accumulators + a tiny combine; kept on a
    # single TC here since realistic score batches are a single block anyway.
    out = pl.pallas_call(
        kernel,
        out_shape=jax.ShapeDtypeStruct((1, 1), jnp.float32),
        grid_spec=pltpu.PrefetchScalarGridSpec(
            num_scalar_prefetch=0,
            grid=(num_phases, num_tiles),
            in_specs=[
                pl.BlockSpec((block_rows, _LANES), lambda ph, t: (t, 0)),
                pl.BlockSpec((block_rows, _LANES), lambda ph, t: (t, 0)),
            ],
            out_specs=pl.BlockSpec((1, 1), lambda ph, t: (0, 0)),
            scratch_shapes=(
                # (8,128) vreg accumulators: sum_x, sum_y, sumsq/qnorm_x,
                # sumsq/qnorm_y, p-norm partial.
                [pltpu.VMEM((_SUBLANES, _LANES), jnp.float32) for _ in range(5)]
                # finalized scalars: mean_x (also shift_x), mean_y (also
                # shift_y), 1/norm_x, 1/norm_y.
                + [pltpu.VMEM((1, 1), jnp.float32) for _ in range(4)]),
        ),
        compiler_params=pltpu.CompilerParams(
            dimension_semantics=("arbitrary", "arbitrary"),
            vmem_limit_bytes=32 * 1024 * 1024),
    )(x, y)
    return out[0, 0]


def _reference_nin_loss(pred, target, loss_weight=1.0, p=1, q=2):
    """Pure-JAX reference mirroring the PyTorch implementation."""
    pred = pred.astype(jnp.float32).reshape(-1)
    target = target.astype(jnp.float32).reshape(-1)
    n = pred.shape[0]
    if n <= 1:
        return loss_weight * jnp.mean(jnp.abs(pred - target))
    vx = pred - jnp.mean(pred)
    vy = target - jnp.mean(target)
    scale = (2.0 ** p) * (float(n) ** max(0.0, 1.0 - p / q))
    eps = 1e-12
    nx = jnp.power(jnp.sum(jnp.power(jnp.abs(vx), q)), 1.0 / q)
    ny = jnp.power(jnp.sum(jnp.power(jnp.abs(vy), q)), 1.0 / q)
    diff = vx / jnp.maximum(nx, eps) - vy / jnp.maximum(ny, eps)
    lnorm = jnp.power(jnp.sum(jnp.power(jnp.abs(diff), p)), 1.0 / p)
    return loss_weight * lnorm / scale


if __name__ == "__main__":
    key = jax.random.PRNGKey(0)
    ks = jax.random.split(key, 10)

    def check(name, out, ref, rtol=3e-4, atol=1e-6):
        out = jax.block_until_ready(out)
        assert jnp.allclose(out, ref, rtol=rtol, atol=atol), (name, out, ref)

    # 1) Typical IQA batch (N=37), defaults p=1 q=2: single resident block,
    #    lane-tail padding, large score mean (exercises the shifted moments).
    n1 = 37
    p1 = 60.0 + 10.0 * jax.random.normal(ks[0], (n1, 1), jnp.float32)
    t1 = 60.0 + 10.0 * jax.random.normal(ks[1], (n1, 1), jnp.float32)
    check("case1", nin_loss(p1, t1), _reference_nin_loss(p1, t1))

    # 2) Lane/tile aligned batch (N=1024): no pad copy, no mask code traced.
    n2 = 1024
    p2 = jax.random.normal(ks[2], (n2, 1), jnp.float32)
    t2 = jax.random.normal(ks[3], (n2, 1), jnp.float32)
    check("case2", nin_loss(p2, t2, loss_weight=0.5),
          _reference_nin_loss(p2, t2, loss_weight=0.5))

    # 3) Multi-tile path (tiny tile cap) with cross-tile vreg accumulators.
    n3 = 3000
    p3 = 3.0 + jax.random.normal(ks[4], (n3, 1), jnp.float32)
    t3 = 3.0 + jax.random.normal(ks[5], (n3, 1), jnp.float32)
    check("case3", nin_loss(p3, t3, max_block_rows=8),
          _reference_nin_loss(p3, t3))

    # 4) p=2, q=2 (squared-diff contribution + sqrt finalize).
    n4 = 64
    p4 = jax.random.normal(ks[6], (n4, 1), jnp.float32)
    t4 = jax.random.normal(ks[7], (n4, 1), jnp.float32)
    check("case4", nin_loss(p4, t4, p=2, q=2),
          _reference_nin_loss(p4, t4, p=2, q=2))

    # 5) q != 2 path (3-phase grid, multiply-chain power): p=1, q=3.
    n5 = 200
    p5 = jax.random.normal(ks[8], (n5, 1), jnp.float32)
    t5 = jax.random.normal(ks[9], (n5, 1), jnp.float32)
    check("case5", nin_loss(p5, t5, p=1, q=3),
          _reference_nin_loss(p5, t5, p=1, q=3))

    # 6) batch_size == 1 fallback (plain L1 loss, no kernel).
    check("case6", nin_loss(p1[:1], t1[:1]), _reference_nin_loss(p1[:1], t1[:1]))

    print("KERNEL_OK")
</pallas_src>

<mosaic_0001>
module attributes {stable_mosaic.version = 11 : i64} {
  func.func @_nin_kernel(%arg0: i32, %arg1: i32, %arg2: memref<8x128xf32, #tpu.memory_space<vmem>>, %arg3: memref<8x128xf32, #tpu.memory_space<vmem>>, %arg4: memref<1x1xf32, #tpu.memory_space<vmem>>, %arg5: memref<8x128xf32, #tpu.memory_space<vmem>>, %arg6: memref<8x128xf32, #tpu.memory_space<vmem>>, %arg7: memref<8x128xf32, #tpu.memory_space<vmem>>, %arg8: memref<8x128xf32, #tpu.memory_space<vmem>>, %arg9: memref<8x128xf32, #tpu.memory_space<vmem>>, %arg10: memref<1x1xf32, #tpu.memory_space<vmem>>, %arg11: memref<1x1xf32, #tpu.memory_space<vmem>>, %arg12: memref<1x1xf32, #tpu.memory_space<vmem>>, %arg13: memref<1x1xf32, #tpu.memory_space<vmem>>) attributes {dimension_semantics = [#tpu.dimension_semantics<arbitrary>, #tpu.dimension_semantics<arbitrary>], iteration_bounds = array<i64: 2, 1>, scalar_prefetch = 0 : i64, scratch_operands = 9 : i64, tpu.core_type = #tpu.core_type<tc>, window_params = [{transform_indices = @transform_0, window_bounds = array<i64: 8, 128>}, {transform_indices = @transform_1, window_bounds = array<i64: 8, 128>}, {pipeline_mode = #tpu.pipeline_mode<synchronous>, transform_indices = @transform_2, window_bounds = array<i64: 1, 1>}]} {
    %c0_i32 = arith.constant 0 : i32
    %0 = arith.cmpi eq, %arg0, %c0_i32 : i32
    %c0_i32_0 = arith.constant 0 : i32
    %1 = arith.cmpi eq, %arg1, %c0_i32_0 : i32
    %2 = arith.andi %0, %1 : i1
    %3 = arith.extui %2 : i1 to i32
    %c0_i32_1 = arith.constant 0 : i32
    %4 = arith.cmpi ne, %3, %c0_i32_1 : i32
    scf.if %4 {
      %cst_6 = arith.constant 0.000000e+00 : f32
      %11 = vector.broadcast %cst_6 : f32 to vector<8x128xf32>
      %c0 = arith.constant 0 : index
      %c0_7 = arith.constant 0 : index
      %12 = vector.load %arg5[%c0, %c0_7] : memref<8x128xf32, #tpu.memory_space<vmem>>, vector<8x128xf32>
      tpu.vector_store %arg5[%c0, %c0_7], %11 {strides = array<i32>} : memref<8x128xf32, #tpu.memory_space<vmem>>, vector<8x128xf32>,
      %c0_8 = arith.constant 0 : index
      %c0_9 = arith.constant 0 : index
      %13 = vector.load %arg6[%c0_8, %c0_9] : memref<8x128xf32, #tpu.memory_space<vmem>>, vector<8x128xf32>
      tpu.vector_store %arg6[%c0_8, %c0_9], %11 {strides = array<i32>} : memref<8x128xf32, #tpu.memory_space<vmem>>, vector<8x128xf32>,
      %c0_10 = arith.constant 0 : index
      %c0_11 = arith.constant 0 : index
      %14 = vector.load %arg7[%c0_10, %c0_11] : memref<8x128xf32, #tpu.memory_space<vmem>>, vector<8x128xf32>
      tpu.vector_store %arg7[%c0_10, %c0_11], %11 {strides = array<i32>} : memref<8x128xf32, #tpu.memory_space<vmem>>, vector<8x128xf32>,
      %c0_12 = arith.constant 0 : index
      %c0_13 = arith.constant 0 : index
      %15 = vector.load %arg8[%c0_12, %c0_13] : memref<8x128xf32, #tpu.memory_space<vmem>>, vector<8x128xf32>
      tpu.vector_store %arg8[%c0_12, %c0_13], %11 {strides = array<i32>} : memref<8x128xf32, #tpu.memory_space<vmem>>, vector<8x128xf32>,
      %c0_14 = arith.constant 0 : index
      %c0_15 = arith.constant 0 : index
      %16 = vector.load %arg9[%c0_14, %c0_15] : memref<8x128xf32, #tpu.memory_space<vmem>>, vector<8x128xf32>
      tpu.vector_store %arg9[%c0_14, %c0_15], %11 {strides = array<i32>} : memref<8x128xf32, #tpu.memory_space<vmem>>, vector<8x128xf32>,
    } else {
    }
    %c0_i32_2 = arith.constant 0 : i32
    %5 = arith.cmpi eq, %arg0, %c0_i32_2 : i32
    %6 = arith.extui %5 : i1 to i32
    %cst = arith.constant 3.700000e+01 : f32
    %cst_3 = arith.constant 9.99999996E-13 : f32
    %c0_i32_4 = arith.constant 0 : i32
    %7 = arith.cmpi ne, %6, %c0_i32_4 : i32
    scf.if %7 {
      %c0 = arith.constant 0 : index
      %c0_6 = arith.constant 0 : index
      %11 = vector.load %arg2[%c0, %c0_6] : memref<8x128xf32, #tpu.memory_space<vmem>>, vector<8x128xf32>
      %c0_7 = arith.constant 0 : index
      %c0_8 = arith.constant 0 : index
      %12 = vector.load %arg3[%c0_7, %c0_8] : memref<8x128xf32, #tpu.memory_space<vmem>>, vector<8x128xf32>
      %c0_i32_9 = arith.constant 0 : i32
      %13 = arith.cmpi eq, %arg1, %c0_i32_9 : i32
      %14 = arith.extui %13 : i1 to i32
      %c0_i32_10 = arith.constant 0 : i32
      %15 = arith.cmpi ne, %14, %c0_i32_10 : i32
      scf.if %15 {
        %71 = vector.extract_strided_slice %11 {offsets = [0, 0], sizes = [1, 1], strides = [1, 1]} : vector<8x128xf32> to vector<1x1xf32>
        %c0_42 = arith.constant 0 : index
        %c0_43 = arith.constant 0 : index
        %72 = vector.load %arg10[%c0_42, %c0_43] : memref<1x1xf32, #tpu.memory_space<vmem>>, vector<1x1xf32>
        tpu.vector_store %arg10[%c0_42, %c0_43], %71 {strides = array<i32>} : memref<1x1xf32, #tpu.memory_space<vmem>>, vector<1x1xf32>,
        %73 = vector.extract_strided_slice %12 {offsets = [0, 0], sizes = [1, 1], strides = [1, 1]} : vector<8x128xf32> to vector<1x1xf32>
        %c0_44 = arith.constant 0 : index
        %c0_45 = arith.constant 0 : index
        %74 = vector.load %arg11[%c0_44, %c0_45] : memref<1x1xf32, #tpu.memory_space<vmem>>, vector<1x1xf32>
        tpu.vector_store %arg11[%c0_44, %c0_45], %73 {strides = array<i32>} : memref<1x1xf32, #tpu.memory_space<vmem>>, vector<1x1xf32>,
      } else {
      }
      %c0_11 = arith.constant 0 : index
      %c0_12 = arith.constant 0 : index
      %16 = vector.load %arg10[%c0_11, %c0_12] : memref<1x1xf32, #tpu.memory_space<vmem>>, vector<1x1xf32>
      %17 = vector.broadcast %16 : vector<1x1xf32> to vector<8x128xf32>
      %18 = arith.subf %11, %17 : vector<8x128xf32>
      %19 = tpu.iota {dimensions = array<i32: 0>} : vector<8x128xi32>
      %20 = tpu.iota {dimensions = array<i32: 1>} : vector<8x128xi32>
      %c8_i32 = arith.constant 8 : i32
      %21 = arith.muli %arg1, %c8_i32 : i32
      %22 = vector.broadcast %21 : i32 to vector<8x128xi32>
      %23 = arith.addi %22, %19 : vector<8x128xi32>
      %c128_i32 = arith.constant 128 : i32
      %24 = vector.broadcast %c128_i32 : i32 to vector<8x128xi32>
      %25 = arith.muli %23, %24 : vector<8x128xi32>
      %26 = arith.addi %25, %20 : vector<8x128xi32>
      %c37_i32 = arith.constant 37 : i32
      %27 = vector.broadcast %c37_i32 : i32 to vector<8x128xi32>
      %28 = arith.cmpi slt, %26, %27 : vector<8x128xi32>
      %cst_13 = arith.constant 0.000000e+00 : f32
      %29 = vector.broadcast %cst_13 : f32 to vector<8x128xf32>
      %30 = arith.select %28, %18, %29 : vector<8x128xi1>, vector<8x128xf32>
      %c0_14 = arith.constant 0 : index
      %c0_15 = arith.constant 0 : index
      %31 = vector.load %arg11[%c0_14, %c0_15] : memref<1x1xf32, #tpu.memory_space<vmem>>, vector<1x1xf32>
      %32 = vector.broadcast %31 : vector<1x1xf32> to vector<8x128xf32>
      %33 = arith.subf %12, %32 : vector<8x128xf32>
      %34 = tpu.iota {dimensions = array<i32: 0>} : vector<8x128xi32>
      %35 = tpu.iota {dimensions = array<i32: 1>} : vector<8x128xi32>
      %c8_i32_16 = arith.constant 8 : i32
      %36 = arith.muli %arg1, %c8_i32_16 : i32
      %37 = vector.broadcast %36 : i32 to vector<8x128xi32>
      %38 = arith.addi %37, %34 : vector<8x128xi32>
      %c128_i32_17 = arith.constant 128 : i32
      %39 = vector.broadcast %c128_i32_17 : i32 to vector<8x128xi32>
      %40 = arith.muli %38, %39 : vector<8x128xi32>
      %41 = arith.addi %40, %35 : vector<8x128xi32>
      %c37_i32_18 = arith.constant 37 : i32
      %42 = vector.broadcast %c37_i32_18 : i32 to vector<8x128xi32>
      %43 = arith.cmpi slt, %41, %42 : vector<8x128xi32>
      %cst_19 = arith.constant 0.000000e+00 : f32
      %44 = vector.broadcast %cst_19 : f32 to vector<8x128xf32>
      %45 = arith.select %43, %33, %44 : vector<8x128xi1>, vector<8x128xf32>
      %c0_20 = arith.constant 0 : index
      %c0_21 = arith.constant 0 : index
      %46 = vector.load %arg5[%c0_20, %c0_21] : memref<8x128xf32, #tpu.memory_space<vmem>>, vector<8x128xf32>
      %47 = vector.shape_cast %30 : vector<8x128xf32> to vector<1x8x128xf32>
      %cst_22 = arith.constant dense<0.000000e+00> : vector<8x128xf32>
      %48 = vector.multi_reduction <add>, %47, %cst_22 [0] : vector<1x8x128xf32> to vector<8x128xf32>
      %49 = arith.addf %46, %48 : vector<8x128xf32>
      %c0_23 = arith.constant 0 : index
      %c0_24 = arith.constant 0 : index
      %50 = vector.load %arg5[%c0_23, %c0_24] : memref<8x128xf32, #tpu.memory_space<vmem>>, vector<8x128xf32>
      tpu.vector_store %arg5[%c0_23, %c0_24], %49 {strides = array<i32>} : memref<8x128xf32, #tpu.memory_space<vmem>>, vector<8x128xf32>,
      %c0_25 = arith.constant 0 : index
      %c0_26 = arith.constant 0 : index
      %51 = vector.load %arg7[%c0_25, %c0_26] : memref<8x128xf32, #tpu.memory_space<vmem>>, vector<8x128xf32>
      %52 = arith.mulf %30, %30 : vector<8x128xf32>
      %53 = vector.shape_cast %52 : vector<8x128xf32> to vector<1x8x128xf32>
      %cst_27 = arith.constant dense<0.000000e+00> : vector<8x128xf32>
      %54 = vector.multi_reduction <add>, %53, %cst_27 [0] : vector<1x8x128xf32> to vector<8x128xf32>
      %55 = arith.addf %51, %54 : vector<8x128xf32>
      %c0_28 = arith.constant 0 : index
      %c0_29 = arith.constant 0 : index
      %56 = vector.load %arg7[%c0_28, %c0_29] : memref<8x128xf32, #tpu.memory_space<vmem>>, vector<8x128xf32>
      tpu.vector_store %arg7[%c0_28, %c0_29], %55 {strides = array<i32>} : memref<8x128xf32, #tpu.memory_space<vmem>>, vector<8x128xf32>,
      %c0_30 = arith.constant 0 : index
      %c0_31 = arith.constant 0 : index
      %57 = vector.load %arg6[%c0_30, %c0_31] : memref<8x128xf32, #tpu.memory_space<vmem>>, vector<8x128xf32>
      %58 = vector.shape_cast %45 : vector<8x128xf32> to vector<1x8x128xf32>
      %cst_32 = arith.constant dense<0.000000e+00> : vector<8x128xf32>
      %59 = vector.multi_reduction <add>, %58, %cst_32 [0] : vector<1x8x128xf32> to vector<8x128xf32>
      %60 = arith.addf %57, %59 : vector<8x128xf32>
      %c0_33 = arith.constant 0 : index
      %c0_34 = arith.constant 0 : index
      %61 = vector.load %arg6[%c0_33, %c0_34] : memref<8x128xf32, #tpu.memory_space<vmem>>, vector<8x128xf32>
      tpu.vector_store %arg6[%c0_33, %c0_34], %60 {strides = array<i32>} : memref<8x128xf32, #tpu.memory_space<vmem>>, vector<8x128xf32>,
      %c0_35 = arith.constant 0 : index
      %c0_36 = arith.constant 0 : index
      %62 = vector.load %arg8[%c0_35, %c0_36] : memref<8x128xf32, #tpu.memory_space<vmem>>, vector<8x128xf32>
      %63 = arith.mulf %45, %45 : vector<8x128xf32>
      %64 = vector.shape_cast %63 : vector<8x128xf32> to vector<1x8x128xf32>
      %cst_37 = arith.constant dense<0.000000e+00> : vector<8x128xf32>
      %65 = vector.multi_reduction <add>, %64, %cst_37 [0] : vector<1x8x128xf32> to vector<8x128xf32>
      %66 = arith.addf %62, %65 : vector<8x128xf32>
      %c0_38 = arith.constant 0 : index
      %c0_39 = arith.constant 0 : index
      %67 = vector.load %arg8[%c0_38, %c0_39] : memref<8x128xf32, #tpu.memory_space<vmem>>, vector<8x128xf32>
      tpu.vector_store %arg8[%c0_38, %c0_39], %66 {strides = array<i32>} : memref<8x128xf32, #tpu.memory_space<vmem>>, vector<8x128xf32>,
      %c0_i32_40 = arith.constant 0 : i32
      %68 = arith.cmpi eq, %arg1, %c0_i32_40 : i32
      %69 = arith.extui %68 : i1 to i32
      %c0_i32_41 = arith.constant 0 : i32
      %70 = arith.cmpi ne, %69, %c0_i32_41 : i32
      scf.if %70 {
        %c0_42 = arith.constant 0 : index
        %c0_43 = arith.constant 0 : index
        %71 = vector.load %arg5[%c0_42, %c0_43] : memref<8x128xf32, #tpu.memory_space<vmem>>, vector<8x128xf32>
        %cst_44 = arith.constant dense<0.000000e+00> : vector<8xf32>
        %72 = vector.multi_reduction <add>, %71, %cst_44 [1] : vector<8x128xf32> to vector<8xf32>
        %73 = vector.shape_cast %72 : vector<8xf32> to vector<8x1xf32>
        %cst_45 = arith.constant dense<0.000000e+00> : vector<1xf32>
        %74 = vector.multi_reduction <add>, %73, %cst_45 [0] : vector<8x1xf32> to vector<1xf32>
        %75 = vector.shape_cast %74 : vector<1xf32> to vector<1x1xf32>
        %76 = vector.broadcast %cst : f32 to vector<1x1xf32>
        %77 = arith.divf %75, %76 : vector<1x1xf32>
        %c0_46 = arith.constant 0 : index
        %c0_47 = arith.constant 0 : index
        %78 = vector.load %arg6[%c0_46, %c0_47] : memref<8x128xf32, #tpu.memory_space<vmem>>, vector<8x128xf32>
        %cst_48 = arith.constant dense<0.000000e+00> : vector<8xf32>
        %79 = vector.multi_reduction <add>, %78, %cst_48 [1] : vector<8x128xf32> to vector<8xf32>
        %80 = vector.shape_cast %79 : vector<8xf32> to vector<8x1xf32>
        %cst_49 = arith.constant dense<0.000000e+00> : vector<1xf32>
        %81 = vector.multi_reduction <add>, %80, %cst_49 [0] : vector<8x1xf32> to vector<1xf32>
        %82 = vector.shape_cast %81 : vector<1xf32> to vector<1x1xf32>
        %83 = vector.broadcast %cst : f32 to vector<1x1xf32>
        %84 = arith.divf %82, %83 : vector<1x1xf32>
        %c0_50 = arith.constant 0 : index
        %c0_51 = arith.constant 0 : index
        %85 = vector.load %arg7[%c0_50, %c0_51] : memref<8x128xf32, #tpu.memory_space<vmem>>, vector<8x128xf32>
        %cst_52 = arith.constant dense<0.000000e+00> : vector<8xf32>
        %86 = vector.multi_reduction <add>, %85, %cst_52 [1] : vector<8x128xf32> to vector<8xf32>
        %87 = vector.shape_cast %86 : vector<8xf32> to vector<8x1xf32>
        %cst_53 = arith.constant dense<0.000000e+00> : vector<1xf32>
        %88 = vector.multi_reduction <add>, %87, %cst_53 [0] : vector<8x1xf32> to vector<1xf32>
        %89 = vector.shape_cast %88 : vector<1xf32> to vector<1x1xf32>
        %90 = vector.broadcast %cst : f32 to vector<1x1xf32>
        %91 = arith.mulf %90, %77 : vector<1x1xf32>
        %92 = arith.mulf %91, %77 : vector<1x1xf32>
        %93 = arith.subf %89, %92 : vector<1x1xf32>
        %cst_54 = arith.constant 0.000000e+00 : f32
        %94 = vector.broadcast %cst_54 : f32 to vector<1x1xf32>
        %95 = arith.maximumf %93, %94 : vector<1x1xf32>
        %c0_55 = arith.constant 0 : index
        %c0_56 = arith.constant 0 : index
        %96 = vector.load %arg8[%c0_55, %c0_56] : memref<8x128xf32, #tpu.memory_space<vmem>>, vector<8x128xf32>
        %cst_57 = arith.constant dense<0.000000e+00> : vector<8xf32>
        %97 = vector.multi_reduction <add>, %96, %cst_57 [1] : vector<8x128xf32> to vector<8xf32>
        %98 = vector.shape_cast %97 : vector<8xf32> to vector<8x1xf32>
        %cst_58 = arith.constant dense<0.000000e+00> : vector<1xf32>
        %99 = vector.multi_reduction <add>, %98, %cst_58 [0] : vector<8x1xf32> to vector<1xf32>
        %100 = vector.shape_cast %99 : vector<1xf32> to vector<1x1xf32>
        %101 = vector.broadcast %cst : f32 to vector<1x1xf32>
        %102 = arith.mulf %101, %84 : vector<1x1xf32>
        %103 = arith.mulf %102, %84 : vector<1x1xf32>
        %104 = arith.subf %100, %103 : vector<1x1xf32>
        %cst_59 = arith.constant 0.000000e+00 : f32
        %105 = vector.broadcast %cst_59 : f32 to vector<1x1xf32>
        %106 = arith.maximumf %104, %105 : vector<1x1xf32>
        %c0_60 = arith.constant 0 : index
        %c0_61 = arith.constant 0 : index
        %107 = vector.load %arg10[%c0_60, %c0_61] : memref<1x1xf32, #tpu.memory_space<vmem>>, vector<1x1xf32>
        %108 = arith.addf %107, %77 : vector<1x1xf32>
        %c0_62 = arith.constant 0 : index
        %c0_63 = arith.constant 0 : index
        %109 = vector.load %arg10[%c0_62, %c0_63] : memref<1x1xf32, #tpu.memory_space<vmem>>, vector<1x1xf32>
        tpu.vector_store %arg10[%c0_62, %c0_63], %108 {strides = array<i32>} : memref<1x1xf32, #tpu.memory_space<vmem>>, vector<1x1xf32>,
        %c0_64 = arith.constant 0 : index
        %c0_65 = arith.constant 0 : index
        %110 = vector.load %arg11[%c0_64, %c0_65] : memref<1x1xf32, #tpu.memory_space<vmem>>, vector<1x1xf32>
        %111 = arith.addf %110, %84 : vector<1x1xf32>
        %c0_66 = arith.constant 0 : index
        %c0_67 = arith.constant 0 : index
        %112 = vector.load %arg11[%c0_66, %c0_67] : memref<1x1xf32, #tpu.memory_space<vmem>>, vector<1x1xf32>
        tpu.vector_store %arg11[%c0_66, %c0_67], %111 {strides = array<i32>} : memref<1x1xf32, #tpu.memory_space<vmem>>, vector<1x1xf32>,
        %113 = math.sqrt %95 : vector<1x1xf32>
        %114 = vector.broadcast %cst_3 : f32 to vector<1x1xf32>
        %115 = arith.maximumf %113, %114 : vector<1x1xf32>
        %cst_68 = arith.constant 1.000000e+00 : f32
        %116 = vector.broadcast %cst_68 : f32 to vector<1x1xf32>
        %117 = arith.divf %116, %115 : vector<1x1xf32>
        %c0_69 = arith.constant 0 : index
        %c0_70 = arith.constant 0 : index
        %118 = vector.load %arg12[%c0_69, %c0_70] : memref<1x1xf32, #tpu.memory_space<vmem>>, vector<1x1xf32>
        tpu.vector_store %arg12[%c0_69, %c0_70], %117 {strides = array<i32>} : memref<1x1xf32, #tpu.memory_space<vmem>>, vector<1x1xf32>,
        %119 = math.sqrt %106 : vector<1x1xf32>
        %120 = vector.broadcast %cst_3 : f32 to vector<1x1xf32>
        %121 = arith.maximumf %119, %120 : vector<1x1xf32>
        %cst_71 = arith.constant 1.000000e+00 : f32
        %122 = vector.broadcast %cst_71 : f32 to vector<1x1xf32>
        %123 = arith.divf %122, %121 : vector<1x1xf32>
        %c0_72 = arith.constant 0 : index
        %c0_73 = arith.constant 0 : index
        %124 = vector.load %arg13[%c0_72, %c0_73] : memref<1x1xf32, #tpu.memory_space<vmem>>, vector<1x1xf32>
        tpu.vector_store %arg13[%c0_72, %c0_73], %123 {strides = array<i32>} : memref<1x1xf32, #tpu.memory_space<vmem>>, vector<1x1xf32>,
      } else {
      }
    } else {
    }
    %c1_i32 = arith.constant 1 : i32
    %8 = arith.cmpi eq, %arg0, %c1_i32 : i32
    %9 = arith.extui %8 : i1 to i32
    %c0_i32_5 = arith.constant 0 : i32
    %10 = arith.cmpi ne, %9, %c0_i32_5 : i32
    scf.if %10 {
      %c0 = arith.constant 0 : index
      %c0_6 = arith.constant 0 : index
      %11 = vector.load %arg2[%c0, %c0_6] : memref<8x128xf32, #tpu.memory_space<vmem>>, vector<8x128xf32>
      %c0_7 = arith.constant 0 : index
      %c0_8 = arith.constant 0 : index
      %12 = vector.load %arg3[%c0_7, %c0_8] : memref<8x128xf32, #tpu.memory_space<vmem>>, vector<8x128xf32>
      %c0_9 = arith.constant 0 : index
      %c0_10 = arith.constant 0 : index
      %13 = vector.load %arg10[%c0_9, %c0_10] : memref<1x1xf32, #tpu.memory_space<vmem>>, vector<1x1xf32>
      %14 = vector.broadcast %13 : vector<1x1xf32> to vector<8x128xf32>
      %15 = arith.subf %11, %14 : vector<8x128xf32>
      %c0_11 = arith.constant 0 : index
      %c0_12 = arith.constant 0 : index
      %16 = vector.load %arg12[%c0_11, %c0_12] : memref<1x1xf32, #tpu.memory_space<vmem>>, vector<1x1xf32>
      %17 = vector.broadcast %16 : vector<1x1xf32> to vector<8x128xf32>
      %18 = arith.mulf %15, %17 : vector<8x128xf32>
      %c0_13 = arith.constant 0 : index
      %c0_14 = arith.constant 0 : index
      %19 = vector.load %arg11[%c0_13, %c0_14] : memref<1x1xf32, #tpu.memory_space<vmem>>, vector<1x1xf32>
      %20 = vector.broadcast %19 : vector<1x1xf32> to vector<8x128xf32>
      %21 = arith.subf %12, %20 : vector<8x128xf32>
      %c0_15 = arith.constant 0 : index
      %c0_16 = arith.constant 0 : index
      %22 = vector.load %arg13[%c0_15, %c0_16] : memref<1x1xf32, #tpu.memory_space<vmem>>, vector<1x1xf32>
      %23 = vector.broadcast %22 : vector<1x1xf32> to vector<8x128xf32>
      %24 = arith.mulf %21, %23 : vector<8x128xf32>
      %25 = arith.subf %18, %24 : vector<8x128xf32>
      %c0_17 = arith.constant 0 : index
      %c0_18 = arith.constant 0 : index
      %26 = vector.load %arg9[%c0_17, %c0_18] : memref<8x128xf32, #tpu.memory_space<vmem>>, vector<8x128xf32>
      %27 = tpu.iota {dimensions = array<i32: 0>} : vector<8x128xi32>
      %28 = tpu.iota {dimensions = array<i32: 1>} : vector<8x128xi32>
      %c8_i32 = arith.constant 8 : i32
      %29 = arith.muli %arg1, %c8_i32 : i32
      %30 = vector.broadcast %29 : i32 to vector<8x128xi32>
      %31 = arith.addi %30, %27 : vector<8x128xi32>
      %c128_i32 = arith.constant 128 : i32
      %32 = vector.broadcast %c128_i32 : i32 to vector<8x128xi32>
      %33 = arith.muli %31, %32 : vector<8x128xi32>
      %34 = arith.addi %33, %28 : vector<8x128xi32>
      %c37_i32 = arith.constant 37 : i32
      %35 = vector.broadcast %c37_i32 : i32 to vector<8x128xi32>
      %36 = arith.cmpi slt, %34, %35 : vector<8x128xi32>
      %cst_19 = arith.constant 0.000000e+00 : f32
      %37 = vector.broadcast %cst_19 : f32 to vector<8x128xf32>
      %38 = arith.select %36, %25, %37 : vector<8x128xi1>, vector<8x128xf32>
      %39 = math.absf %38 : vector<8x128xf32>
      %40 = vector.shape_cast %39 : vector<8x128xf32> to vector<1x8x128xf32>
      %cst_20 = arith.constant dense<0.000000e+00> : vector<8x128xf32>
      %41 = vector.multi_reduction <add>, %40, %cst_20 [0] : vector<1x8x128xf32> to vector<8x128xf32>
      %42 = arith.addf %26, %41 : vector<8x128xf32>
      %c0_21 = arith.constant 0 : index
      %c0_22 = arith.constant 0 : index
      %43 = vector.load %arg9[%c0_21, %c0_22] : memref<8x128xf32, #tpu.memory_space<vmem>>, vector<8x128xf32>
      tpu.vector_store %arg9[%c0_21, %c0_22], %42 {strides = array<i32>} : memref<8x128xf32, #tpu.memory_space<vmem>>, vector<8x128xf32>,
      %c0_i32_23 = arith.constant 0 : i32
      %44 = arith.cmpi eq, %arg1, %c0_i32_23 : i32
      %45 = arith.extui %44 : i1 to i32
      %c0_i32_24 = arith.constant 0 : i32
      %46 = arith.cmpi ne, %45, %c0_i32_24 : i32
      scf.if %46 {
        %c0_25 = arith.constant 0 : index
        %c0_26 = arith.constant 0 : index
        %47 = vector.load %arg9[%c0_25, %c0_26] : memref<8x128xf32, #tpu.memory_space<vmem>>, vector<8x128xf32>
        %cst_27 = arith.constant dense<0.000000e+00> : vector<8xf32>
        %48 = vector.multi_reduction <add>, %47, %cst_27 [1] : vector<8x128xf32> to vector<8xf32>
        %49 = vector.shape_cast %48 : vector<8xf32> to vector<8x1xf32>
        %cst_28 = arith.constant dense<0.000000e+00> : vector<1xf32>
        %50 = vector.multi_reduction <add>, %49, %cst_28 [0] : vector<8x1xf32> to vector<1xf32>
        %51 = vector.shape_cast %50 : vector<1xf32> to vector<1x1xf32>
        %cst_29 = arith.constant 0.0821994915 : f32
        %52 = vector.broadcast %cst_29 : f32 to vector<1x1xf32>
        %53 = arith.mulf %51, %52 : vector<1x1xf32>
        %c0_30 = arith.constant 0 : index
        %c0_31 = arith.constant 0 : index
        %54 = vector.load %arg4[%c0_30, %c0_31] : memref<1x1xf32, #tpu.memory_space<vmem>>, vector<1x1xf32>
        tpu.vector_store %arg4[%c0_30, %c0_31], %53 {strides = array<i32>} : memref<1x1xf32, #tpu.memory_space<vmem>>, vector<1x1xf32>,
      } else {
      }
    } else {
    }
    return
  }
  func.func @transform_0(%arg0: i32, %arg1: i32) -> (i32, i32) {
    %c0_i32 = arith.constant 0 : i32
    %c0_i32_0 = arith.constant 0 : i32
    return %arg1, %c0_i32 : i32, i32
  }
  func.func @transform_1(%arg0: i32, %arg1: i32) -> (i32, i32) {
    %c0_i32 = arith.constant 0 : i32
    %c0_i32_0 = arith.constant 0 : i32
    return %arg1, %c0_i32 : i32, i32
  }
  func.func @transform_2(%arg0: i32, %arg1: i32) -> (i32, i32) {
    %c0_i32 = arith.constant 0 : i32
    %c0_i32_0 = arith.constant 0 : i32
    %c0_i32_1 = arith.constant 0 : i32
    return %c0_i32, %c0_i32_0 : i32, i32
  }
}

</mosaic_0001>

<llo_original>
// kernel: tpu_custom_call.1
$region0: #{tpu_custom_call.1}
  #allocation0 [shape = 'u32[]', space=smem, size = 0x4, offset = 0x4, fixed_abs, tag = 'smem constant byte address 0x4 - core index']
  #allocation1 [shape = 'u32[144,128]{1,0:T(1,128)}', space=vmem, size = 0x12000, scoped, tag = 'internal scratch']
  #allocation2 [shape = 'f32[8,128]{1,0:T(8,128)}', space=vmem, size = 0x1000, scoped, tag = 'scratch operand']
  #allocation3 [shape = 'f32[8,128]{1,0:T(8,128)}', space=vmem, size = 0x1000, scoped, tag = 'scratch operand']
  #allocation4 [shape = 'f32[8,128]{1,0:T(8,128)}', space=vmem, size = 0x1000, scoped, tag = 'scratch operand']
  #allocation5 [shape = 'f32[8,128]{1,0:T(8,128)}', space=vmem, size = 0x1000, scoped, tag = 'scratch operand']
  #allocation6 [shape = 'f32[8,128]{1,0:T(8,128)}', space=vmem, size = 0x1000, scoped, tag = 'scratch operand']
  #allocation7 [shape = 'f32[1,1]{1,0:T(1,128)}', space=vmem, size = 0x200, scoped, tag = 'scratch operand']
  #allocation8 [shape = 'f32[1,1]{1,0:T(1,128)}', space=vmem, size = 0x200, scoped, tag = 'scratch operand']
  #allocation9 [shape = 'f32[1,1]{1,0:T(1,128)}', space=vmem, size = 0x200, scoped, tag = 'scratch operand']
  #allocation10 [shape = 'f32[1,1]{1,0:T(1,128)}', space=vmem, size = 0x200, scoped, tag = 'scratch operand']
  %s0 = inlined_call_operand.hbm [shape: f32[8,128], index: 0, kind: input, shape index: {}]
  %s1 = inlined_call_operand.hbm [shape: f32[8,128], index: 1, kind: input, shape index: {}]
  %s2 = inlined_call_operand.hbm [shape: f32[1,1], index: 2, kind: output, shape index: {}]
  %s3 = sld [smem:[#allocation0]]
  $region73: #{tpu_custom_call.1} parent=0
    _
  %s5 = ssub.s32 1, %s3
  %s6 = scalar_select 0, %s5, %s3
  $region1: #{tpu_custom_call.1} parent=0
    #allocation11 [shape = 'u8[4096]{0}', space=vmem, size = 0x1000, scoped, tag = 'input window, operand 0, single buffered']
    #allocation12 [shape = 's32[2]{0}', space=sflag, size = 0x8, scoped, tag = 'scoped memory for tpu_custom_call.1']
    #allocation13 [shape = 's32[2]{0}', space=sflag, size = 0x8, scoped, tag = 'scoped memory for tpu_custom_call.1']
    #allocation14 [shape = 'u8[4096]{0}', space=vmem, size = 0x1000, scoped, tag = 'input window, operand 1, single buffered']
    #allocation15 [shape = 's32[1]{0}', space=sflag, size = 0x4, scoped, tag = 'scoped memory for tpu_custom_call.1']
    #allocation16 [shape = 'u8[512]{0}', space=vmem, size = 0x400, scoped, tag = 'output window, operand 0, single buffered']
    %7 = vsyncpa [#allocation12], 0
    %8 = vsyncpa [#allocation15], 0
    %9 = vsyncpa [#allocation13], 0
    loop: start=0, step=1, limit=4
    $region2: #{tpu_custom_call.1} parent=1 // loop_pre_header
      _
    $region3: #{tpu_custom_call.1} parent=1 // loop_header
      %s11 = sphi 0, %s15
      %p12 = scmp.ge.s32.totalorder %s11, 4
      %s18 = sphi 0, %s30
      %s19 = sphi 0, %s26
      %s20 = sphi 0, %s18
      %s21 = sphi 0, %s19
      %s22 = sphi 0, %s20
      %s23 = sphi 0, %s21
      %s33 = sphi 0, %s35
      %s36 = sphi 0, %s33
      %s37 = sphi 0, %s36
      %s53 = sphi 0, %s37
      %s59 = sphi 0, %s61
      %s62 = sphi 0, %s59
      %s63 = sphi 0, %s62
      %s79 = sphi 0, %s63
      %s83 = sphi 0, %s83
      %s85 = sphi 0, %s83
      %s86 = sphi 0, %s85
      %s100 = sphi 0, %s86
    $region4: #{tpu_custom_call.1} parent=1 // loop_header_branch
      %14 = sbr.rel (%p12) target = $region8
    $region5: #{tpu_custom_call.1} parent=1 // loop_body
      %s16 = ssub.s32 %s11, 1
      %s17 = ssub.s32 %s11, 2
      %s24 = sadd.s32 1, %s19
      %p25 = scmp.ge.s32.totalorder %s24, 1
      %s26 = scalar_select %p25, 0, %s24
      %s27 = sadd.s32 1, %s18
      %s28 = scalar_select %p25, %s27, %s18
      %p29 = scmp.ge.s32.totalorder %s28, 2
      %s30 = scalar_select %p29, 0, %s28
      %s31 = ssub.s32 %s19, %s26
      %p32 = scmp.eq.s32.totalorder %s31, 0
      %s34 = sadd.s32 %s33, 1
      %s35 = scalar_select %p32, %s33, %s34
      %p38 = pneg %p32
      %p39 = scmp.eq.s32.totalorder %s11, 1
      %p40 = por %p38, %p39
      %p41 = scmp.ne.s32.totalorder %s33, %s36
      %p42 = scmp.eq.s32.totalorder %s11, 0
      %p43 = por %p41, %p42
      %p44 = scmp.ne.s32.totalorder %s33, %s36
      %p45 = scmp.eq.s32.totalorder %s16, 1
      %p46 = por %p44, %p45
      %p47 = scmp.ne.s32.totalorder %s36, %s37
      %p48 = scmp.eq.s32.totalorder %s16, 0
      %p49 = por %p47, %p48
      %p50 = scmp.ne.s32.totalorder %s36, %s37
      %p51 = scmp.eq.s32.totalorder %s17, 1
      %p52 = por %p50, %p51
      %p54 = scmp.ne.s32.totalorder %s37, %s53
      %p55 = scmp.eq.s32.totalorder %s17, 0
      %p56 = por %p54, %p55
      %s57 = ssub.s32 %s19, %s26
      %p58 = scmp.eq.s32.totalorder %s57, 0
      %s60 = sadd.s32 %s59, 1
      %s61 = scalar_select %p58, %s59, %s60
      %p64 = pneg %p58
      %p65 = scmp.eq.s32.totalorder %s11, 1
      %p66 = por %p64, %p65
      %p67 = scmp.ne.s32.totalorder %s59, %s62
      %p68 = scmp.eq.s32.totalorder %s11, 0
      %p69 = por %p67, %p68
      %p70 = scmp.ne.s32.totalorder %s59, %s62
      %p71 = scmp.eq.s32.totalorder %s16, 1
      %p72 = por %p70, %p71
      %p73 = scmp.ne.s32.totalorder %s62, %s63
      %p74 = scmp.eq.s32.totalorder %s16, 0
      %p75 = por %p73, %p74
      %p76 = scmp.ne.s32.totalorder %s62, %s63
      %p77 = scmp.eq.s32.totalorder %s17, 1
      %p78 = por %p76, %p77
      %p80 = scmp.ne.s32.totalorder %s63, %s79
      %p81 = scmp.eq.s32.totalorder %s17, 0
      %p82 = por %p80, %p81
      %s84 = sadd.s32 %s83, 1
      %p87 = scmp.eq.s32.totalorder %s11, 1
      %p88 = scmp.ne.s32.totalorder %s83, %s85
      %p89 = scmp.eq.s32.totalorder %s11, 0
      %p90 = por %p88, %p89
      %p91 = scmp.ne.s32.totalorder %s83, %s85
      %p92 = scmp.eq.s32.totalorder %s16, 1
      %p93 = por %p91, %p92
      %p94 = scmp.ne.s32.totalorder %s85, %s86
      %p95 = scmp.eq.s32.totalorder %s16, 0
      %p96 = por %p94, %p95
      %p97 = scmp.ne.s32.totalorder %s85, %s86
      %p98 = scmp.eq.s32.totalorder %s17, 1
      %p99 = por %p97, %p98
      %p101 = scmp.ne.s32.totalorder %s86, %s100
      %p102 = scmp.eq.s32.totalorder %s17, 0
      %p103 = por %p101, %p102
      %p104 = scmp.le.s32.totalorder 1, %s11
      %p105 = scmp.lt.s32.totalorder %s11, 3
      %p106 = pnand %p104, %p105
      %p107 = pneg %p106
      // Predicated region
      $region9: #{tpu_custom_call.1} parent=5 // pred_check
        _
      $region10: #{tpu_custom_call.1} parent=5 // pred_check_branch
        %109 = sbr.rel (%p106) target = $region12
      $region11: #{tpu_custom_call.1} parent=5 // pred_region
        %s110 = ssub.s32 %s11, 1
        // Predicated region
        $region13: #{tpu_custom_call.1} parent=11 // pred_check
          %p111 = pneg %p49
        $region14: #{tpu_custom_call.1} parent=11 // pred_check_branch
          %113 = sbr.rel (%p111) target = $region16
        $region15: #{tpu_custom_call.1} parent=11 // pred_region
          %s115 = ssub.s32 128, 128
          %116 = vsyncadd [#allocation12], %s115
          %s117 = smul.addr %s21, 128
          %s118 = scalar_lea.hbm %s0, %s117
          %s120 = sshll.u32 [#allocation11], 4
          %s121 = int_to_ptr.vmem [resolvable:$true] %s120
          %123 = dma.hbm_to_vmem [thread:$0]  %s118, 128, %s121, [#allocation12]
        $region16: #{tpu_custom_call.1} parent=11 // pred_fallthru
          _
        // Predicated region
        $region17: #{tpu_custom_call.1} parent=11 // pred_check
          %p124 = pneg %p75
        $region18: #{tpu_custom_call.1} parent=11 // pred_check_branch
          %126 = sbr.rel (%p124) target = $region20
        $region19: #{tpu_custom_call.1} parent=11 // pred_region
          %s128 = ssub.s32 128, 128
          %129 = vsyncadd [#allocation15], %s128
          %s130 = smul.addr %s21, 128
          %s131 = scalar_lea.hbm %s1, %s130
          %s133 = sshll.u32 [#allocation14], 4
          %s134 = int_to_ptr.vmem [resolvable:$true] %s133
          %136 = dma.hbm_to_vmem [thread:$0]  %s131, 128, %s134, [#allocation15]
        $region20: #{tpu_custom_call.1} parent=11 // pred_fallthru
          _
      $region12: #{tpu_custom_call.1} parent=5 // pred_fallthru
        _
      %p137 = scmp.lt.s32.totalorder %s11, 2
      // Predicated region
      $region21: #{tpu_custom_call.1} parent=5 // pred_check
        %p138 = pneg %p137
      $region22: #{tpu_custom_call.1} parent=5 // pred_check_branch
        %140 = sbr.rel (%p138) target = $region24
      $region23: #{tpu_custom_call.1} parent=5 // pred_region
        _
      $region24: #{tpu_custom_call.1} parent=5 // pred_fallthru
        _
      %p141 = scmp.le.s32.totalorder 1, %s11
      %p142 = scmp.lt.s32.totalorder %s11, 3
      %p143 = pnand %p141, %p142
      %p144 = pneg %p143
      // Predicated region
      $region25: #{tpu_custom_call.1} parent=5 // pred_check
        _
      $region26: #{tpu_custom_call.1} parent=5 // pred_check_branch
        %146 = sbr.rel (%p143) target = $region28
      $region27: #{tpu_custom_call.1} parent=5 // pred_region
        %s147 = ssub.s32 %s11, 1
        // Predicated region
        $region29: #{tpu_custom_call.1} parent=27 // pred_check
          %p148 = pneg %p49
        $region30: #{tpu_custom_call.1} parent=27 // pred_check_branch
          %150 = sbr.rel (%p148) target = $region32
        $region31: #{tpu_custom_call.1} parent=27 // pred_region
          %151 = dma.done [#allocation12], 128
        $region32: #{tpu_custom_call.1} parent=27 // pred_fallthru
          _
        // Predicated region
        $region33: #{tpu_custom_call.1} parent=27 // pred_check
          %p152 = pneg %p75
        $region34: #{tpu_custom_call.1} parent=27 // pred_check_branch
          %154 = sbr.rel (%p152) target = $region36
        $region35: #{tpu_custom_call.1} parent=27 // pred_region
          %155 = dma.done [#allocation15], 128
        $region36: #{tpu_custom_call.1} parent=27 // pred_fallthru
          _
        %p156 = pneg %p49
        %p157 = pneg %p46
        %p158 = pneg %p75
        %p159 = pneg %p72
        %p160 = pneg %p96
        %p161 = pneg %p93
        %p162 = scmp.eq.s32.totalorder %s20, 0
        %p163 = scmp.eq.s32.totalorder %s21, 0
        %p164 = pnand %p162, %p163
        %p165 = pneg %p164
        // Predicated region
        $region37: #{tpu_custom_call.1} parent=27 // pred_check
          _
        $region38: #{tpu_custom_call.1} parent=27 // pred_check_branch
          %167 = sbr.rel (%p164) target = $region40
        $region39: #{tpu_custom_call.1} parent=27 // pred_region
          %168 = vst [vmem:[#allocation2] sm:$0xff] 0.0
          %169 = vst [vmem:[#allocation3] sm:$0xff] 0.0
          %170 = vst [vmem:[#allocation4] sm:$0xff] 0.0
          %171 = vst [vmem:[#allocation5] sm:$0xff] 0.0
          %172 = vst [vmem:[#allocation6] sm:$0xff] 0.0
        $region40: #{tpu_custom_call.1} parent=27 // pred_fallthru
          _
        // Predicated region
        $region41: #{tpu_custom_call.1} parent=27 // pred_check
          %p173 = pneg %p162
        $region42: #{tpu_custom_call.1} parent=27 // pred_check_branch
          %175 = sbr.rel (%p173) target = $region44
        $region43: #{tpu_custom_call.1} parent=27 // pred_region
          %v176 = vld [vmem:[#allocation11] sm:$0xff]
          %v177 = vld [vmem:[#allocation14] sm:$0xff]
          // Predicated region
          $region45: #{tpu_custom_call.1} parent=43 // pred_check
            %p178 = pneg %p163
          $region46: #{tpu_custom_call.1} parent=43 // pred_check_branch
            %180 = sbr.rel (%p178) target = $region48
          $region47: #{tpu_custom_call.1} parent=43 // pred_region
            %vm181 = vcmask 0
            %182 = vst.msk [vmem:[#allocation7] sm:$0x1] %vm181, %v176
            %183 = vst.msk [vmem:[#allocation8] sm:$0x1] %vm181, %v177
          $region48: #{tpu_custom_call.1} parent=43 // pred_fallthru
            _
          %v184 = vld [vmem:[#allocation7] sm:$0x1]
          %v186 = vlaneseq
          %v187 = vshrl.u32 %v186, 7
          %v188 = vsub.s32 0, %v187
          %v189 = vrot.slane %v184, %v188
          %190 = vset.pattern.permute.xlu0 0
          %191 = vperm.xlu0 %190, %v189
          %v192 = vpop.permute.xlu0 %191
          %v194 = vsub.f32 %v176, %v192
          %v195 = vlaneseq
          %v196 = vshrl.u32 %v195, 7
          %v197 = vlaneseq
          %v198 = vand.u32 %v197, 127
          %s199 = smul.u32 %s21, 8
          %v200 = vstv %s199
          %v201 = vadd.s32 %v200, %v196
          %v202 = vmul.u32 %v201, 128
          %v203 = vadd.s32 %v202, %v198
          %vm204 = vcmp.lt.s32.totalorder %v203, 37
          %v205 = vsel %vm204, %v194, 0.0
          %v206 = vld [vmem:[#allocation8] sm:$0x1]
          %v208 = vlaneseq
          %v209 = vshrl.u32 %v208, 7
          %v210 = vsub.s32 0, %v209
          %v211 = vrot.slane %v206, %v210
          %212 = vset.pattern.permute.xlu0 0
          %213 = vperm.xlu0 %212, %v211
          %v214 = vpop.permute.xlu0 %213
          %v216 = vsub.f32 %v177, %v214
          %v217 = vsel %vm204, %v216, 0.0
          %v218 = vld [vmem:[#allocation2] sm:$0xff]
          %v219 = vadd.f32 %v205, 0.0
          %v220 = vadd.f32 %v218, %v219
          %221 = vst [vmem:[#allocation2] sm:$0xff] %v220
          %v222 = vld [vmem:[#allocation4] sm:$0xff]
          %v223 = vmul.f32 %v205, %v205
          %v224 = vadd.f32 %v223, 0.0
          %v225 = vadd.f32 %v222, %v224
          %226 = vst [vmem:[#allocation4] sm:$0xff] %v225
          %v227 = vld [vmem:[#allocation3] sm:$0xff]
          %v228 = vadd.f32 %v217, 0.0
          %v229 = vadd.f32 %v227, %v228
          %230 = vst [vmem:[#allocation3] sm:$0xff] %v229
          %v231 = vld [vmem:[#allocation5] sm:$0xff]
          %v232 = vmul.f32 %v217, %v217
          %v233 = vadd.f32 %v232, 0.0
          %v234 = vadd.f32 %v231, %v233
          %235 = vst [vmem:[#allocation5] sm:$0xff] %v234
          // Predicated region
          $region49: #{tpu_custom_call.1} parent=43 // pred_check
            %p236 = pneg %p163
          $region50: #{tpu_custom_call.1} parent=43 // pred_check_branch
            %238 = sbr.rel (%p236) target = $region52
          $region51: #{tpu_custom_call.1} parent=43 // pred_region
            %v239 = vld [vmem:[#allocation2] sm:$0xff]
            %240 = vadd.xlane.f32.xlu0 %v239
            %v241 = vpop.xlane.xlu0 %240
            %v242 = vrot.slane %v241, 4
            %v243 = vadd.f32 %v241, %v242
            %v244 = vrot.slane %v243, 2
            %v245 = vadd.f32 %v243, %v244
            %v246 = vrot.slane %v245, 1
            %v247 = vadd.f32 %v245, %v246
            %v248 = vrcp.pop 37.0
            %v249 = vmul.f32 %v247, %v248
            %v250 = vld [vmem:[#allocation3] sm:$0xff]
            %251 = vadd.xlane.f32.xlu0 %v250
            %v252 = vpop.xlane.xlu0 %251
            %v253 = vrot.slane %v252, 4
            %v254 = vadd.f32 %v252, %v253
            %v255 = vrot.slane %v254, 2
            %v256 = vadd.f32 %v254, %v255
            %v257 = vrot.slane %v256, 1
            %v258 = vadd.f32 %v256, %v257
            %v259 = vmul.f32 %v258, %v248
            %v260 = vld [vmem:[#allocation4] sm:$0xff]
            %261 = vadd.xlane.f32.xlu0 %v260
            %v262 = vpop.xlane.xlu0 %261
            %v263 = vrot.slane %v262, 4
            %v264 = vadd.f32 %v262, %v263
            %v265 = vrot.slane %v264, 2
            %v266 = vadd.f32 %v264, %v265
            %v267 = vrot.slane %v266, 1
            %v268 = vadd.f32 %v266, %v267
            %v269 = vmul.f32 %v249, 37.0
            %v270 = vmul.f32 %v269, %v249
            %v271 = vsub.f32 %v268, %v270
            %v272 = vmax.f32 %v271, 0.0
            %v273 = vld [vmem:[#allocation5] sm:$0xff]
            %274 = vadd.xlane.f32.xlu0 %v273
            %v275 = vpop.xlane.xlu0 %274
            %v276 = vrot.slane %v275, 4
            %v277 = vadd.f32 %v275, %v276
            %v278 = vrot.slane %v277, 2
            %v279 = vadd.f32 %v277, %v278
            %v280 = vrot.slane %v279, 1
            %v281 = vadd.f32 %v279, %v280
            %v282 = vmul.f32 %v259, 37.0
            %v283 = vmul.f32 %v282, %v259
            %v284 = vsub.f32 %v281, %v283
            %v285 = vmax.f32 %v284, 0.0
            %v286 = vld [vmem:[#allocation7] sm:$0x1]
            %v287 = vadd.f32 %v286, %v249
            %vm288 = vcmask 0
            %289 = vst.msk [vmem:[#allocation7] sm:$0x1] %vm288, %v287
            %v290 = vld [vmem:[#allocation8] sm:$0x1]
            %v291 = vadd.f32 %v290, %v259
            %292 = vst.msk [vmem:[#allocation8] sm:$0x1] %vm288, %v291
            %v293 = vrsqrt.pop %v272
            %v294 = vmul.f32 %v272, %v293
            %vm295 = vcmp.eq.f32.partialorder %v272, inf
            %v296 = vsel %vm295, %v272, %v294
            %vm297 = vcmp.eq.f32.partialorder %v272, 0.0
            %v298 = vand.u32 %v272, 2147483648
            %v299 = vsel %vm297, %v298, %v296
            %v300 = vmax.f32 %v299, 1e-12
            %v301 = vrcp.pop %v300
            %v302 = vmul.f32 1.0, %v301
            %303 = vst.msk [vmem:[#allocation9] sm:$0x1] %vm288, %v302
            %v304 = vrsqrt.pop %v285
            %v305 = vmul.f32 %v285, %v304
            %vm306 = vcmp.eq.f32.partialorder %v285, inf
            %v307 = vsel %vm306, %v285, %v305
            %vm308 = vcmp.eq.f32.partialorder %v285, 0.0
            %v309 = vand.u32 %v285, 2147483648
            %v310 = vsel %vm308, %v309, %v307
            %v311 = vmax.f32 %v310, 1e-12
            %v312 = vrcp.pop %v311
            %v313 = vmul.f32 1.0, %v312
            %314 = vst.msk [vmem:[#allocation10] sm:$0x1] %vm288, %v313
          $region52: #{tpu_custom_call.1} parent=43 // pred_fallthru
            _
        $region44: #{tpu_custom_call.1} parent=27 // pred_fallthru
          _
        %p315 = scmp.eq.s32.totalorder %s20, 1
        // Predicated region
        $region53: #{tpu_custom_call.1} parent=27 // pred_check
          %p316 = pneg %p315
        $region54: #{tpu_custom_call.1} parent=27 // pred_check_branch
          %318 = sbr.rel (%p316) target = $region56
        $region55: #{tpu_custom_call.1} parent=27 // pred_region
          %v319 = vld [vmem:[#allocation11] sm:$0xff]
          %v320 = vld [vmem:[#allocation14] sm:$0xff]
          %v321 = vld [vmem:[#allocation7] sm:$0x1]
          %v323 = vlaneseq
          %v324 = vshrl.u32 %v323, 7
          %v325 = vsub.s32 0, %v324
          %v326 = vrot.slane %v321, %v325
          %327 = vset.pattern.permute.xlu0 0
          %328 = vperm.xlu0 %327, %v326
          %v329 = vpop.permute.xlu0 %328
          %v331 = vsub.f32 %v319, %v329
          %v332 = vld [vmem:[#allocation9] sm:$0x1]
          %v334 = vlaneseq
          %v335 = vshrl.u32 %v334, 7
          %v336 = vsub.s32 0, %v335
          %v337 = vrot.slane %v332, %v336
          %338 = vset.pattern.permute.xlu0 0
          %339 = vperm.xlu0 %338, %v337
          %v340 = vpop.permute.xlu0 %339
          %v342 = vmul.f32 %v331, %v340
          %v343 = vld [vmem:[#allocation8] sm:$0x1]
          %v345 = vlaneseq
          %v346 = vshrl.u32 %v345, 7
          %v347 = vsub.s32 0, %v346
          %v348 = vrot.slane %v343, %v347
          %349 = vset.pattern.permute.xlu0 0
          %350 = vperm.xlu0 %349, %v348
          %v351 = vpop.permute.xlu0 %350
          %v353 = vsub.f32 %v320, %v351
          %v354 = vld [vmem:[#allocation10] sm:$0x1]
          %v356 = vlaneseq
          %v357 = vshrl.u32 %v356, 7
          %v358 = vsub.s32 0, %v357
          %v359 = vrot.slane %v354, %v358
          %360 = vset.pattern.permute.xlu0 0
          %361 = vperm.xlu0 %360, %v359
          %v362 = vpop.permute.xlu0 %361
          %v364 = vmul.f32 %v353, %v362
          %v365 = vsub.f32 %v342, %v364
          %v366 = vld [vmem:[#allocation6] sm:$0xff]
          %v367 = vlaneseq
          %v368 = vshrl.u32 %v367, 7
          %v369 = vlaneseq
          %v370 = vand.u32 %v369, 127
          %s371 = smul.u32 %s21, 8
          %v372 = vstv %s371
          %v373 = vadd.s32 %v372, %v368
          %v374 = vmul.u32 %v373, 128
          %v375 = vadd.s32 %v374, %v370
          %vm376 = vcmp.lt.s32.totalorder %v375, 37
          %v377 = vsel %vm376, %v365, 0.0
          %v378 = vand.u32 2147483647, %v377
          %v379 = vadd.f32 %v378, 0.0
          %v380 = vadd.f32 %v366, %v379
          %381 = vst [vmem:[#allocation6] sm:$0xff] %v380
          // Predicated region
          $region57: #{tpu_custom_call.1} parent=55 // pred_check
            %p382 = pneg %p163
          $region58: #{tpu_custom_call.1} parent=55 // pred_check_branch
            %384 = sbr.rel (%p382) target = $region60
          $region59: #{tpu_custom_call.1} parent=55 // pred_region
            %v385 = vld [vmem:[#allocation6] sm:$0xff]
            %386 = vadd.xlane.f32.xlu0 %v385
            %v387 = vpop.xlane.xlu0 %386
            %v388 = vrot.slane %v387, 4
            %v389 = vadd.f32 %v387, %v388
            %v390 = vrot.slane %v389, 2
            %v391 = vadd.f32 %v389, %v390
            %v392 = vrot.slane %v391, 1
            %v393 = vadd.f32 %v391, %v392
            %v394 = vmul.f32 %v393, 0.08219949
            %vm395 = vcmask 0
            %396 = vst.msk [vmem:[#allocation16] sm:$0x1] %vm395, %v394
          $region60: #{tpu_custom_call.1} parent=55 // pred_fallthru
            _
        $region56: #{tpu_custom_call.1} parent=27 // pred_fallthru
          _
        // Predicated region
        $region61: #{tpu_custom_call.1} parent=27 // pred_check
          %p397 = pneg %p93
        $region62: #{tpu_custom_call.1} parent=27 // pred_check_branch
          %399 = sbr.rel (%p397) target = $region64
        $region63: #{tpu_custom_call.1} parent=27 // pred_region
          %s401 = ssub.s32 16, 16
          %402 = vsyncadd [#allocation13], %s401
          %s404 = sshll.u32 [#allocation16], 4
          %s405 = int_to_ptr.vmem [resolvable:$true] %s404
          %407 = dma.vmem_to_hbm [thread:$0]  %s405, 16, %s2, [#allocation13]
        $region64: #{tpu_custom_call.1} parent=27 // pred_fallthru
          _
        // Predicated region
        $region65: #{tpu_custom_call.1} parent=27 // pred_check
          %p408 = pneg %p93
        $region66: #{tpu_custom_call.1} parent=27 // pred_check_branch
          %410 = sbr.rel (%p408) target = $region68
        $region67: #{tpu_custom_call.1} parent=27 // pred_region
          %411 = dma.done [#allocation13], 16
        $region68: #{tpu_custom_call.1} parent=27 // pred_fallthru
          _
      $region28: #{tpu_custom_call.1} parent=5 // pred_fallthru
        _
      %p412 = scmp.le.s32.totalorder 2, %s11
      // Predicated region
      $region69: #{tpu_custom_call.1} parent=5 // pred_check
        %p413 = pneg %p412
      $region70: #{tpu_custom_call.1} parent=5 // pred_check_branch
        %415 = sbr.rel (%p413) target = $region72
      $region71: #{tpu_custom_call.1} parent=5 // pred_region
        %s416 = ssub.s32 %s11, 2
      $region72: #{tpu_custom_call.1} parent=5 // pred_fallthru
        _
    $region6: #{tpu_custom_call.1} parent=1 // loop_footer
      %s15 = sadd.s32 1, %s11
    $region7: #{tpu_custom_call.1} parent=1 // loop_footer_branch
      %10 = sbr.rel target = $region3
    $region8: #{tpu_custom_call.1} parent=1 // loop_exit
      _
    %417 = vsyncpa [#allocation12], 1
    %s418 = scalar_lea.sflag [#allocation12], 1
    %419 = vsyncpa %s418, 1
    %420 = vsyncpa [#allocation15], 1
    %421 = vsyncpa [#allocation13], 1
    %s422 = scalar_lea.sflag [#allocation13], 1
    %423 = vsyncpa %s422, 1

</llo_original>
